<compile_context>
chip_gen: v6e
topology: v6e:2x2x1
jax: 0.10.0
libtpu: 0.0.40
codegen_flags: <defaults>
</compile_context>

<pallas_src>
import functools
import math

import jax
import jax.numpy as jnp
import numpy as np
from jax.experimental import pallas as pl
from jax.experimental.pallas import tpu as pltpu


# -----------------------------------------------------------------------------
# One-time on-device probe of pltpu.roll's rotation direction (cached).
# -----------------------------------------------------------------------------
@functools.lru_cache(maxsize=None)
def _roll_matches_jnp_roll() -> bool:
    """True iff pltpu.roll(x, s, axis) == jnp.roll(x, s, axis)."""
    def probe(x_ref, o_ref):
        o_ref[...] = pltpu.roll(x_ref[...], 1, axis=1)

    x = jnp.tile(jnp.arange(128, dtype=jnp.float32)[None, :], (8, 1))
    y = np.asarray(jax.device_get(
        pl.pallas_call(probe,
                       out_shape=jax.ShapeDtypeStruct((8, 128), jnp.float32))(x)))
    if y[0, 0] == 127.0 and y[0, 2] == 1.0:
        return True          # elements move toward higher indices (jnp.roll)
    if y[0, 0] == 1.0 and y[0, 2] == 3.0:
        return False         # opposite convention
    raise RuntimeError(f"pltpu.roll produced an unexpected permutation: {y[0, :4]}")


# -----------------------------------------------------------------------------
# Fused kernel: entire DynamicsNetwork forward (single program, grid=()).
# -----------------------------------------------------------------------------
def _dynamics_kernel(action_ref, x_ref, mask_ref, wa_ref, ba_ref,
                     convw_ref, convb_ref, bng_ref, bnb_ref, *rest,
                     N, H, W, C, num_blocks, n_lin, tap_shifts):
    """All refs in VMEM.  Layout: activations (C, M), M = N*H*W on lanes.

    action_ref : (1, N) int32
    x_ref      : (C, M) f32
    mask_ref   : (9, M) f32   per-tap 0/1 in-bounds masks
    wa_ref     : (C, A) f32   1x1 action-conv weight (out, in)
    ba_ref     : (C, 1) f32
    convw_ref  : (L, C, 9C) bf16/f32  im2col-packed 3x3 conv weights
    convb_ref  : (L, C, 1) f32
    bng_ref    : (L, C, 1) f32
    bnb_ref    : (L, C, 1) f32
    rest       : [rw0, rb0, rw1, rb1, ...] reward-head (out,in)/(out,1) f32,
                 then state_out (C, M) f32, reward_out (out_dim, N) f32.
    """
    lin_refs = rest[:2 * n_lin]
    state_out_ref = rest[2 * n_lin]
    reward_out_ref = rest[2 * n_lin + 1]

    f32 = jnp.float32
    mxu_dtype = convw_ref.dtype
    HW = H * W
    M = N * HW
    A = wa_ref.shape[1]
    inv_m = 1.0 / float(M)

    # Hoisted once above the layer loop: per-tap boundary masks as (1, M) rows.
    # The center tap (t == 4) is always in-bounds -> no mask multiply.
    tap_mask = [None if t == 4 else mask_ref[t:t + 1, :] for t in range(9)]

    def conv_bn_relu(x, layer, residual=None):
        """3x3 same-pad conv (im2col, ONE MXU dot) + train-mode BN (+res) + ReLU."""
        taps = []
        for t in range(9):
            if t == 4:
                taps.append(x.astype(mxu_dtype))
            else:
                # Lane rotation (XLU); the mask zeroes exactly the wrapped /
                # cross-image / out-of-bounds source pixels (zero padding).
                shifted = pltpu.roll(x, tap_shifts[t], axis=1)
                taps.append((shifted * tap_mask[t]).astype(mxu_dtype))
        patch = jnp.concatenate(taps, axis=0)                       # (9C, M)
        acc = jnp.dot(convw_ref[layer], patch,
                      preferred_element_type=f32)                    # (C, M)
        acc = acc + convb_ref[layer]                                 # conv bias

        # Training-mode BatchNorm over the M = N*H*W lanes; two-pass (stable),
        # biased variance, eps = 1e-5 (PyTorch defaults).
        mean = jnp.sum(acc, axis=1, keepdims=True) * inv_m           # (C, 1)
        cent = acc - mean
        var = jnp.sum(cent * cent, axis=1, keepdims=True) * inv_m
        y = cent * (bng_ref[layer] * jax.lax.rsqrt(var + 1e-5)) + bnb_ref[layer]
        if residual is not None:
            y = y + residual
        return jnp.maximum(y, 0.0)

    # ---- 1x1 conv of one-hot action planes == per-sample channel bias --------
    a_iota = jax.lax.broadcasted_iota(jnp.int32, (A, N), 0)
    onehot_t = (a_iota == action_ref[...]).astype(f32)               # (A, N)
    act_feat_t = jnp.dot(wa_ref[...], onehot_t,
                         preferred_element_type=f32) + ba_ref[...]   # (C, N)
    # Sample selector: sel[n, m] = 1 iff flattened pixel m belongs to sample n.
    n_iota = jax.lax.broadcasted_iota(jnp.int32, (N, M), 0)
    m_iota = jax.lax.broadcasted_iota(jnp.int32, (N, M), 1)
    sel = ((m_iota >= n_iota * HW) & (m_iota < (n_iota + 1) * HW)).astype(f32)
    x = x_ref[...] + jnp.dot(act_feat_t, sel, preferred_element_type=f32)

    # ---- conv_state -> BN -> ReLU, then the residual tower --------------------
    x = conv_bn_relu(x, 0)
    # Python unroll is fine at demo depth; use lax.fori_loop for deep towers.
    for b in range(num_blocks):
        identity = x
        h1 = conv_bn_relu(x, 1 + 2 * b)
        x = conv_bn_relu(h1, 2 + 2 * b, residual=identity)

    # ---- global min-max normalization (whole tensor, as in the reference) ----
    xmin = jnp.min(x)
    xmax = jnp.max(x)
    x = (x - xmin) * (1.0 / (xmax - xmin + 1e-5))
    state_out_ref[...] = x.astype(state_out_ref.dtype)               # lane-dense

    # ---- reward head on the NORMALIZED state: spatial mean -> MLP ------------
    mT = jax.lax.broadcasted_iota(jnp.int32, (M, N), 0)
    nT = jax.lax.broadcasted_iota(jnp.int32, (M, N), 1)
    sel_t = ((mT >= nT * HW) & (mT < (nT + 1) * HW)).astype(f32)     # (M, N)
    h = jnp.dot(x, sel_t, preferred_element_type=f32) * (1.0 / float(HW))  # (C, N)
    for i in range(n_lin):
        h = jnp.dot(lin_refs[2 * i][...], h,
                    preferred_element_type=f32) + lin_refs[2 * i + 1][...]
        if i < n_lin - 1:
            h = jnp.maximum(h, 0.0)
    reward_out_ref[...] = h.astype(reward_out_ref.dtype)             # (out_dim, N)


# -----------------------------------------------------------------------------
# Wrapper
# -----------------------------------------------------------------------------
def _tap_masks(N, H, W):
    """(9, N*H*W) f32 masks: mask[t, m] == 1 iff tap t (dy=t//3, dx=t%3) of
    output pixel m reads an in-bounds pixel of the same image (Conv2d padding=1
    zero-padding semantics, including the flattened inter-image boundaries)."""
    hh = np.tile(np.repeat(np.arange(H), W), N)
    ww = np.tile(np.arange(W), N * H)
    masks = np.zeros((9, N * H * W), np.float32)
    for dy in range(3):
        for dx in range(3):
            hs, ws = hh + dy - 1, ww + dx - 1
            masks[dy * 3 + dx] = (hs >= 0) & (hs < H) & (ws >= 0) & (ws < W)
    return masks


def dynamics_forward(params, hidden_state_nchw, action):
    """hidden_state: (B, C, H, W) f32 (PyTorch NCHW); action: (B,) int.
    Returns (next_hidden_state NCHW f32, reward logits (B, 2*support+1) f32)."""
    N, C, H, W = hidden_state_nchw.shape
    HW = H * W
    M = N * HW

    # Kernel layout: channels on sublanes, flattened pixels on lanes -> (C, M).
    x_cm = jnp.transpose(hidden_state_nchw, (1, 0, 2, 3)).reshape(C, M)
    action_row = action.reshape(1, N).astype(jnp.int32)
    masks = jnp.asarray(_tap_masks(N, H, W))                          # (9, M)

    L = params['conv_w'].shape[0]
    num_blocks = (L - 1) // 2
    n_lin = len(params['reward_w'])
    out_dim = params['reward_w'][-1].shape[0]

    # Per-tap flattened source offset and the matching pltpu.roll shift
    # (direction verified once on-device; cached).
    with jax.ensure_compile_time_eval():
        roll_like_jnp = _roll_matches_jnp_roll()
    offs = [(dy - 1) * W + (dx - 1) for dy in range(3) for dx in range(3)]
    tap_shifts = tuple(((-o) % M) if roll_like_jnp else (o % M) for o in offs)

    reward_flat = []
    for rw, rb in zip(params['reward_w'], params['reward_b']):
        reward_flat += [rw, rb]

    operands = [action_row, x_cm, masks,
                params['conv_action_w'], params['conv_action_b'],
                params['conv_w'], params['conv_b'],
                params['bn_g'], params['bn_b'], *reward_flat]

    # Scoped-VMEM budget: never below the default limit, raised with the model.
    op_bytes = sum(int(np.prod(o.shape)) * o.dtype.itemsize for o in operands)
    out_bytes = (C * M + out_dim * N) * 4
    vmem_limit = int(min(64 << 20, max(32 << 20, 4 * (op_bytes + out_bytes))))

    kernel = functools.partial(
        _dynamics_kernel, N=N, H=H, W=W, C=C, num_blocks=num_blocks,
        n_lin=n_lin, tap_shifts=tap_shifts)

    state_cm, reward_t = pl.pallas_call(
        kernel,
        out_shape=(jax.ShapeDtypeStruct((C, M), jnp.float32),
                   jax.ShapeDtypeStruct((out_dim, N), jnp.float32)),
        in_specs=[pl.BlockSpec(memory_space=pltpu.MemorySpace.VMEM)] * len(operands),
        out_specs=(pl.BlockSpec(memory_space=pltpu.MemorySpace.VMEM),
                   pl.BlockSpec(memory_space=pltpu.MemorySpace.VMEM)),
        compiler_params=pltpu.CompilerParams(vmem_limit_bytes=vmem_limit),
    )(*operands)

    next_state = jnp.transpose(state_cm.reshape(C, N, H, W), (1, 0, 2, 3))
    return next_state, reward_t.T


# -----------------------------------------------------------------------------
# Parameter init (PyTorch-default-style uniform), pre-packed for the kernel.
# -----------------------------------------------------------------------------
def init_params(key, num_channels, num_blocks, action_space_size,
                fc_reward_layers, support_size, mxu_dtype=jnp.bfloat16):
    """Packed layouts:
      conv_action_w : (C, A)      == nn.Conv2d(A, C, 1).weight.reshape(C, A)
      conv_action_b : (C, 1)
      conv_w        : (L, C, 9C)  == weight.transpose(0, 2, 3, 1).reshape(C, 9C),
                                     tap-major (t = dy*3+dx); MXU operand dtype
      conv_b/bn_g/bn_b : (L, C, 1)
      reward_w[i]   : (out, in)   == native nn.Linear orientation
      reward_b[i]   : (out, 1)
    Set mxu_dtype=jnp.float32 for exact f32 parity with the PyTorch module.
    """
    C = num_channels
    A = action_space_size
    L = 1 + 2 * num_blocks
    n_keys = 2 + 2 * L + 2 * (len(fc_reward_layers) + 1)
    keys = iter(jax.random.split(key, n_keys))

    def uinit(shape, fan_in):
        bound = 1.0 / math.sqrt(fan_in)
        return jax.random.uniform(next(keys), shape, jnp.float32, -bound, bound)

    conv_action_w = uinit((C, A), A)
    conv_action_b = uinit((C, 1), A)

    conv_w = jnp.stack(
        [uinit((C, 3, 3, C), 9 * C).reshape(C, 9 * C) for _ in range(L)],
        axis=0).astype(mxu_dtype)
    conv_b = jnp.stack([uinit((C, 1), 9 * C) for _ in range(L)], axis=0)
    bn_g = jnp.ones((L, C, 1), jnp.float32)
    bn_b = jnp.zeros((L, C, 1), jnp.float32)

    reward_w, reward_b = [], []
    cur = C
    for out_features in list(fc_reward_layers) + [2 * support_size + 1]:
        reward_w.append(uinit((out_features, cur), cur))
        reward_b.append(uinit((out_features, 1), cur))
        cur = out_features

    return {
        'conv_action_w': conv_action_w, 'conv_action_b': conv_action_b,
        'conv_w': conv_w, 'conv_b': conv_b, 'bn_g': bn_g, 'bn_b': bn_b,
        'reward_w': reward_w, 'reward_b': reward_b,
    }


# -----------------------------------------------------------------------------
# Demo
# -----------------------------------------------------------------------------
if __name__ == "__main__":
    NUM_CHANNELS = 32
    NUM_BLOCKS = 2
    ACTION_SPACE = 4
    FC_REWARD_LAYERS = [32]
    SUPPORT_SIZE = 5
    B, H, W = 2, 8, 8

    key = jax.random.PRNGKey(0)
    kp, kh, ka = jax.random.split(key, 3)

    params = init_params(kp, NUM_CHANNELS, NUM_BLOCKS, ACTION_SPACE,
                         FC_REWARD_LAYERS, SUPPORT_SIZE)
    hidden_state = jax.random.normal(kh, (B, NUM_CHANNELS, H, W), jnp.float32)
    action = jax.random.randint(ka, (B,), 0, ACTION_SPACE, jnp.int32)

    # Warm the (cached) roll-direction probe eagerly, outside any trace.
    _roll_matches_jnp_roll()

    fwd = jax.jit(dynamics_forward)
    next_state, reward = fwd(params, hidden_state, action)
    jax.block_until_ready((next_state, reward))

    assert next_state.shape == (B, NUM_CHANNELS, H, W)
    assert reward.shape == (B, 2 * SUPPORT_SIZE + 1)
    assert bool(jnp.isfinite(next_state).all())
    assert bool(jnp.isfinite(reward).all())
    print("KERNEL_OK")
</pallas_src>

<mosaic_0001>
module attributes {stable_mosaic.version = 11 : i64} {
  func.func @probe(%arg0: memref<8x128xf32, #tpu.memory_space<vmem>>, %arg1: memref<8x128xf32, #tpu.memory_space<vmem>>) attributes {dimension_semantics = [], scalar_prefetch = 0 : i64, scratch_operands = 0 : i64, tpu.core_type = #tpu.core_type<tc>} {
    %c0 = arith.constant 0 : index
    %c0_0 = arith.constant 0 : index
    %0 = vector.load %arg0[%c0, %c0_0] : memref<8x128xf32, #tpu.memory_space<vmem>>, vector<8x128xf32>
    %c1_i32 = arith.constant 1 : i32
    %1 = tpu.dynamic_rotate %0 by %c1_i32 dim 1 : vector<8x128xf32>, i32 -> vector<8x128xf32>
    %c0_1 = arith.constant 0 : index
    %c0_2 = arith.constant 0 : index
    %2 = vector.load %arg1[%c0_1, %c0_2] : memref<8x128xf32, #tpu.memory_space<vmem>>, vector<8x128xf32>
    tpu.vector_store %arg1[%c0_1, %c0_2], %1 {strides = array<i32>} : memref<8x128xf32, #tpu.memory_space<vmem>>, vector<8x128xf32>,
    return
  }
}

</mosaic_0001>

<llo_original>
// kernel: tpu_custom_call.1
$region0: #{tpu_custom_call.1}
  #allocation0 [shape = 'u32[]', space=smem, size = 0x4, offset = 0x4, fixed_abs, tag = 'smem constant byte address 0x4 - core index']
  #allocation1 [shape = 'u32[144,128]{1,0:T(1,128)}', space=vmem, size = 0x12000, scoped, tag = 'internal scratch']
  %s0 = inlined_call_operand.hbm [shape: f32[8,128], index: 0, kind: input, shape index: {}]
  %s1 = inlined_call_operand.hbm [shape: f32[8,128], index: 1, kind: output, shape index: {}]
  %s2 = sld [smem:[#allocation0]]
  $region18: #{tpu_custom_call.1} parent=0
    _
  %s4 = ssub.s32 1, %s2
  %s5 = scalar_select 0, %s4, %s2
  $region1: #{tpu_custom_call.1} parent=0
    #allocation2 [shape = 'u8[4096]{0}', space=vmem, size = 0x1000, scoped, tag = 'input window, operand 0, single buffered']
    #allocation3 [shape = 's32[1]{0}', space=sflag, size = 0x4, scoped, tag = 'scoped memory for tpu_custom_call.1']
    #allocation4 [shape = 's32[1]{0}', space=sflag, size = 0x4, scoped, tag = 'scoped memory for tpu_custom_call.1']
    #allocation5 [shape = 'u8[4096]{0}', space=vmem, size = 0x1000, scoped, tag = 'output window, operand 0, single buffered']
    %6 = vsyncpa [#allocation3], 0
    %7 = vsyncpa [#allocation4], 0
    // Predicated region
    $region2: #{tpu_custom_call.1} parent=1 // pred_check
      _
    $region3: #{tpu_custom_call.1} parent=1 // pred_check_branch
      %9 = sbr.rel (0) target = $region5
    $region4: #{tpu_custom_call.1} parent=1 // pred_region
      %s11 = ssub.s32 128, 128
      %12 = vsyncadd [#allocation3], %s11
      %s14 = sshll.u32 [#allocation2], 4
      %s15 = int_to_ptr.vmem [resolvable:$true] %s14
      %17 = dma.hbm_to_vmem [thread:$0]  %s0, 128, %s15, [#allocation3]
    $region5: #{tpu_custom_call.1} parent=1 // pred_fallthru
      _
    // Predicated region
    $region6: #{tpu_custom_call.1} parent=1 // pred_check
      _
    $region7: #{tpu_custom_call.1} parent=1 // pred_check_branch
      %19 = sbr.rel (0) target = $region9
    $region8: #{tpu_custom_call.1} parent=1 // pred_region
      %20 = dma.done [#allocation3], 128
    $region9: #{tpu_custom_call.1} parent=1 // pred_fallthru
      _
    %v21 = vld [vmem:[#allocation2] sm:$0xff]
    %22 = vrot.lane.b32.xlu0 %v21, 1
    %v23 = vpop.permute.xlu0 %22
    %24 = vst [vmem:[#allocation5] sm:$0xff] %v23
    // Predicated region
    $region10: #{tpu_custom_call.1} parent=1 // pred_check
      _
    $region11: #{tpu_custom_call.1} parent=1 // pred_check_branch
      %26 = sbr.rel (0) target = $region13
    $region12: #{tpu_custom_call.1} parent=1 // pred_region
      %s28 = ssub.s32 128, 128
      %29 = vsyncadd [#allocation4], %s28
      %s31 = sshll.u32 [#allocation5], 4
      %s32 = int_to_ptr.vmem [resolvable:$true] %s31
      %34 = dma.vmem_to_hbm [thread:$0]  %s32, 128, %s1, [#allocation4]
    $region13: #{tpu_custom_call.1} parent=1 // pred_fallthru
      _
    // Predicated region
    $region14: #{tpu_custom_call.1} parent=1 // pred_check
      _
    $region15: #{tpu_custom_call.1} parent=1 // pred_check_branch
      %36 = sbr.rel (0) target = $region17
    $region16: #{tpu_custom_call.1} parent=1 // pred_region
      %37 = dma.done [#allocation4], 128
    $region17: #{tpu_custom_call.1} parent=1 // pred_fallthru
      _
    %38 = vsyncpa [#allocation3], 1
    %39 = vsyncpa [#allocation4], 1

</llo_original>
